<compile_context>
chip_gen: v7x
topology: tpu7x:2x2x1
jax: 0.10.0
libtpu: 0.0.40
codegen_flags: <defaults>
</compile_context>

<pallas_src>
import jax
import jax.numpy as jnp
from jax.experimental import pallas as pl
from jax.experimental.pallas import tpu as pltpu


def linear_kernel(x_ref, w_ref, b_ref, o_ref):
    """y = x @ W.T + b for one batch tile.

    x_ref: (TM, IN) f32 in VMEM          (batch tile of activations)
    w_ref: (OUT, IN) f32 in VMEM         (PyTorch layout, resident across grid)
    b_ref: (OUT,)    f32 in SMEM         (two scalars)
    o_ref: (TM, OUT) f32 in VMEM
    """
    x = x_ref[...]                                   # (TM, IN)
    out_f = o_ref.shape[-1]                          # static (2) -> unrolled loop
    cols = []
    for j in range(out_f):
        w_row = w_ref[j:j + 1, :]                    # (1, IN), sublane-broadcast
        # VPU multiply + XLU lane reduce; skips the MXU entirely for K=10, N=2.
        col = jnp.sum(x * w_row, axis=-1, keepdims=True) + b_ref[j]   # (TM, 1)
        cols.append(col)
    o_ref[...] = jnp.concatenate(cols, axis=-1).astype(o_ref.dtype)


def _round_up(n, m):
    return ((n + m - 1) // m) * m


def simple_model_forward(x, weight, bias, *, tm=512):
    """Forward of SimpleModel: y = x @ weight.T + bias.

    x:      (B, 10) f32
    weight: (2, 10) f32   (nn.Linear layout, used as-is)
    bias:   (2,)    f32
    tm:     batch rows per grid step (raise towards 1024-2048 for huge batches;
            default keeps double-buffered tiles a few hundred KiB of VMEM).
    """
    B, in_f = x.shape
    out_f, in_f_w = weight.shape
    assert in_f == in_f_w, "weight/in_features mismatch"

    tm = min(tm, _round_up(B, 8))                    # keep sublane-aligned tiles
    b_pad = _round_up(B, tm)
    if b_pad != B:                                   # pad batch to a whole number of tiles
        x = jnp.pad(x, ((0, b_pad - B), (0, 0)))

    grid = (b_pad // tm,)

    cost = pl.CostEstimate(
        flops=2 * B * in_f * out_f,
        transcendentals=0,
        bytes_accessed=4 * (B * in_f + out_f * in_f + out_f + B * out_f),
    )

    y = pl.pallas_call(
        linear_kernel,
        out_shape=jax.ShapeDtypeStruct((b_pad, out_f), x.dtype),
        grid=grid,
        in_specs=[
            # Batch-tiled activations: each (tm, 10) HBM tile is contiguous.
            pl.BlockSpec((tm, in_f), lambda i: (i, 0)),
            # Whole weight matrix, constant index -> stays resident in VMEM.
            pl.BlockSpec((out_f, in_f), lambda i: (0, 0)),
            # Bias: two scalars in SMEM (no VMEM tile, no extra DMA descriptor).
            pl.BlockSpec(memory_space=pltpu.MemorySpace.SMEM),
        ],
        out_specs=pl.BlockSpec((tm, out_f), lambda i: (i, 0)),
        compiler_params=pltpu.CompilerParams(
            dimension_semantics=("parallel",),       # batch axis splits across TCs
        ),
        cost_estimate=cost,
    )(x, weight, bias)

    return y[:B] if b_pad != B else y


if __name__ == "__main__":
    key = jax.random.PRNGKey(0)
    kx1, kx2, kw, kb = jax.random.split(key, 4)

    IN, OUT = 10, 2
    bound = 1.0 / jnp.sqrt(jnp.float32(IN))
    weight = jax.random.uniform(kw, (OUT, IN), dtype=jnp.float32, minval=-bound, maxval=bound)
    bias = jax.random.uniform(kb, (OUT,), dtype=jnp.float32, minval=-bound, maxval=bound)

    fwd = jax.jit(simple_model_forward)

    # Case 1: tiny batch consistent with the original module usage.
    x_small = jax.random.normal(kx1, (8, IN), dtype=jnp.float32)
    y_small = jax.block_until_ready(fwd(x_small, weight, bias))
    ref_small = x_small @ weight.T + bias
    assert y_small.shape == (8, OUT)
    assert jnp.allclose(y_small, ref_small, atol=1e-5, rtol=1e-5), "small-batch mismatch"

    # Case 2: larger, non-tile-multiple batch — exercises the batch grid + padding path.
    x_big = jax.random.normal(kx2, (1000, IN), dtype=jnp.float32)
    y_big = jax.block_until_ready(fwd(x_big, weight, bias))
    ref_big = x_big @ weight.T + bias
    assert y_big.shape == (1000, OUT)
    assert jnp.allclose(y_big, ref_big, atol=1e-5, rtol=1e-5), "large-batch mismatch"

    print("KERNEL_OK")
</pallas_src>

<mosaic_0001>
module attributes {stable_mosaic.version = 11 : i64} {
  func.func @linear_kernel(%arg0: i32, %arg1: memref<8x10xf32, #tpu.memory_space<vmem>>, %arg2: memref<2x10xf32, #tpu.memory_space<vmem>>, %arg3: memref<2xf32, #tpu.memory_space<smem>>, %arg4: memref<8x2xf32, #tpu.memory_space<vmem>>) attributes {dimension_semantics = [#tpu.dimension_semantics<parallel>], iteration_bounds = array<i64: 1>, scalar_prefetch = 0 : i64, scratch_operands = 0 : i64, tpu.core_type = #tpu.core_type<tc>, window_params = [{transform_indices = @transform_0, window_bounds = array<i64: 8, 10>}, {pipeline_mode = #tpu.pipeline_mode<synchronous>, transform_indices = @transform_1, window_bounds = array<i64: 2, 10>}, {transform_indices = @transform_2, window_bounds = array<i64: 2>}, {transform_indices = @transform_3, window_bounds = array<i64: 8, 2>}]} {
    %c0 = arith.constant 0 : index
    %c0_0 = arith.constant 0 : index
    %0 = vector.load %arg1[%c0, %c0_0] : memref<8x10xf32, #tpu.memory_space<vmem>>, vector<8x10xf32>
    %c0_1 = arith.constant 0 : index
    %c0_2 = arith.constant 0 : index
    %1 = vector.load %arg2[%c0_1, %c0_2] : memref<2x10xf32, #tpu.memory_space<vmem>>, vector<1x10xf32>
    %2 = vector.broadcast %1 : vector<1x10xf32> to vector<8x10xf32>
    %3 = arith.mulf %0, %2 : vector<8x10xf32>
    %cst = arith.constant dense<0.000000e+00> : vector<8xf32>
    %4 = vector.multi_reduction <add>, %3, %cst [1] : vector<8x10xf32> to vector<8xf32>
    %5 = vector.shape_cast %4 : vector<8xf32> to vector<8x1xf32>
    %c0_3 = arith.constant 0 : index
    %6 = memref.load %arg3[%c0_3] : memref<2xf32, #tpu.memory_space<smem>>
    %7 = vector.broadcast %6 : f32 to vector<8x1xf32>
    %8 = arith.addf %5, %7 : vector<8x1xf32>
    %c1 = arith.constant 1 : index
    %c0_4 = arith.constant 0 : index
    %9 = vector.load %arg2[%c1, %c0_4] : memref<2x10xf32, #tpu.memory_space<vmem>>, vector<1x10xf32>
    %10 = vector.broadcast %9 : vector<1x10xf32> to vector<8x10xf32>
    %11 = arith.mulf %0, %10 : vector<8x10xf32>
    %cst_5 = arith.constant dense<0.000000e+00> : vector<8xf32>
    %12 = vector.multi_reduction <add>, %11, %cst_5 [1] : vector<8x10xf32> to vector<8xf32>
    %13 = vector.shape_cast %12 : vector<8xf32> to vector<8x1xf32>
    %c1_6 = arith.constant 1 : index
    %14 = memref.load %arg3[%c1_6] : memref<2xf32, #tpu.memory_space<smem>>
    %15 = vector.broadcast %14 : f32 to vector<8x1xf32>
    %16 = arith.addf %13, %15 : vector<8x1xf32>
    %17 = tpu.concatenate %8, %16 in 1 : vector<8x1xf32>, vector<8x1xf32> -> vector<8x2xf32>
    %c0_7 = arith.constant 0 : index
    %c0_8 = arith.constant 0 : index
    %18 = vector.load %arg4[%c0_7, %c0_8] : memref<8x2xf32, #tpu.memory_space<vmem>>, vector<8x2xf32>
    tpu.vector_store %arg4[%c0_7, %c0_8], %17 {strides = array<i32>} : memref<8x2xf32, #tpu.memory_space<vmem>>, vector<8x2xf32>,
    return
  }
  func.func @transform_0(%arg0: i32) -> (i32, i32) {
    %c0_i32 = arith.constant 0 : i32
    %c0_i32_0 = arith.constant 0 : i32
    return %arg0, %c0_i32 : i32, i32
  }
  func.func @transform_1(%arg0: i32) -> (i32, i32) {
    %c0_i32 = arith.constant 0 : i32
    %c0_i32_0 = arith.constant 0 : i32
    %c0_i32_1 = arith.constant 0 : i32
    return %c0_i32, %c0_i32_0 : i32, i32
  }
  func.func @transform_2(%arg0: i32) -> i32 {
    %c0_i32 = arith.constant 0 : i32
    %c0_i32_0 = arith.constant 0 : i32
    return %c0_i32 : i32
  }
  func.func @transform_3(%arg0: i32) -> (i32, i32) {
    %c0_i32 = arith.constant 0 : i32
    %c0_i32_0 = arith.constant 0 : i32
    return %arg0, %c0_i32 : i32, i32
  }
}

</mosaic_0001>

<llo_original>
// kernel: simple_model_forward.1
$region0: #{simple_model_forward.1}
  #allocation0 [shape = 'u32[]', space=smem, size = 0x4, offset = 0x4, fixed_abs, tag = 'smem constant byte address 0x4 - core index']
  #allocation1 [shape = 'u32[144,128]{1,0:T(1,128)}', space=vmem, size = 0x12000, scoped, tag = 'internal scratch']
  %s0 = inlined_call_operand.hbm [shape: f32[8,10], index: 0, kind: input, shape index: {}]
  %s1 = inlined_call_operand.vmem [shape: f32[2,10], index: 1, kind: input, shape index: {}]
  %s2 = inlined_call_operand.vmem [shape: f32[2], index: 2, kind: input, shape index: {}]
  %s3 = inlined_call_operand.vmem [shape: f32[8,2], index: 3, kind: output, shape index: {}]
  %s4 = sld [smem:[#allocation0]]
  $region30: #{simple_model_forward.1} parent=0
    _
  %s6 = ssub.s32 1, %s4
  %s7 = scalar_select 0, %s6, %s4
  $region1: #{simple_model_forward.1} parent=0
    #allocation2 [shape = 'u8[4096]{0}', space=vmem, size = 0x1000, scoped, tag = 'input window, operand 0, single buffered']
    #allocation3 [shape = 's32[1]{0}', space=sflag, size = 0x4, scoped, tag = 'scoped memory for simple_model_forward.1']
    #allocation4 [shape = 's32[1]{0}', space=sflag, size = 0x4, scoped, tag = 'scoped memory for simple_model_forward.1']
    #allocation5 [shape = 'u8[512]{0}', space=smem, size = 0x200, scoped, tag = 'input window, operand 2, single buffered']
    %8 = vsyncpa [#allocation3], 0
    %9 = vsyncpa [#allocation4], 0
    // Predicated region
    $region2: #{simple_model_forward.1} parent=1 // pred_check
      _
    $region3: #{simple_model_forward.1} parent=1 // pred_check_branch
      %11 = sbr.rel (0) target = $region5
    $region4: #{simple_model_forward.1} parent=1 // pred_region
      %s13 = ssub.s32 128, 128
      %14 = vsyncadd [#allocation3], %s13
      %s16 = sshll.u32 [#allocation2], 4
      %s17 = int_to_ptr.vmem [resolvable:$true] %s16
      %19 = dma.hbm_to_vmem [thread:$0]  %s0, 128, %s17, [#allocation3]
    $region5: #{simple_model_forward.1} parent=1 // pred_fallthru
      _
    // Predicated region
    $region6: #{simple_model_forward.1} parent=1 // pred_check
      _
    $region7: #{simple_model_forward.1} parent=1 // pred_check_branch
      %21 = sbr.rel (0) target = $region9
    $region8: #{simple_model_forward.1} parent=1 // pred_region
      _
    $region9: #{simple_model_forward.1} parent=1 // pred_fallthru
      _
    // Predicated region
    $region10: #{simple_model_forward.1} parent=1 // pred_check
      _
    $region11: #{simple_model_forward.1} parent=1 // pred_check_branch
      %23 = sbr.rel (0) target = $region13
    $region12: #{simple_model_forward.1} parent=1 // pred_region
      %s25 = ssub.s32 16, 16
      %26 = vsyncadd [#allocation4], %s25
      %s28 = sshll.u32 %s2, 4
      %s29 = int_to_ptr.vmem [resolvable:$true] %s28
      %31 = dma.vmem_to_smem %s29, 16, [#allocation5], [#allocation4]
    $region13: #{simple_model_forward.1} parent=1 // pred_fallthru
      _
    // Predicated region
    $region14: #{simple_model_forward.1} parent=1 // pred_check
      _
    $region15: #{simple_model_forward.1} parent=1 // pred_check_branch
      %33 = sbr.rel (0) target = $region17
    $region16: #{simple_model_forward.1} parent=1 // pred_region
      %34 = dma.done [#allocation3], 128
    $region17: #{simple_model_forward.1} parent=1 // pred_fallthru
      _
    // Predicated region
    $region18: #{simple_model_forward.1} parent=1 // pred_check
      _
    $region19: #{simple_model_forward.1} parent=1 // pred_check_branch
      %36 = sbr.rel (0) target = $region21
    $region20: #{simple_model_forward.1} parent=1 // pred_region
      %37 = dma.done [#allocation4], 16
    $region21: #{simple_model_forward.1} parent=1 // pred_fallthru
      _
    %38 = sfence
    %v39 = vld [vmem:[#allocation2] sm:$0xff]
    %v40 = vld [vmem:[%s1] sm:$0x1]
    %v41 = vlaneseq
    %v42 = vshrl.u32 %v41, 7
    %v43 = vsub.s32 0, %v42
    %v44 = vrot.slane %v40, %v43
    %v45 = vmul.f32 %v39, %v44
    %vm46 = vcmask 80896
    %v47 = vsel %vm46, %v45, 0.0
    %48 = vadd.xlane.f32.xlu0 %v47
    %v49 = vpop.xlane.xlu0 %48
    %s50 = sld [smem:[#allocation5]]
    %v51 = vstv %s50
    %v52 = vadd.f32 %v49, %v51
    %v53 = vld [vmem:[%s1 + $0x1] sm:$0x1]
    %v54 = vlaneseq
    %v55 = vshrl.u32 %v54, 7
    %v56 = vsub.s32 0, %v55
    %v57 = vrot.slane %v53, %v56
    %v58 = vmul.f32 %v39, %v57
    %v59 = vsel %vm46, %v58, 0.0
    %60 = vadd.xlane.f32.xlu0 %v59
    %v61 = vpop.xlane.xlu0 %60
    %s62 = sld [smem:[#allocation5 + $0x1]]
    %v63 = vstv %s62
    %v64 = vadd.f32 %v61, %v63
    %vm65 = vcmask 7168
    %v66 = vsel %vm65, %v52, %v64
    %vm67 = vcmask 15360
    %68 = vst.msk [vmem:[%s3] sm:$0xff] %vm67, %v66
    // Predicated region
    $region22: #{simple_model_forward.1} parent=1 // pred_check
      _
    $region23: #{simple_model_forward.1} parent=1 // pred_check_branch
      %70 = sbr.rel (0) target = $region25
    $region24: #{simple_model_forward.1} parent=1 // pred_region
      _
    $region25: #{simple_model_forward.1} parent=1 // pred_fallthru
      _
    // Predicated region
    $region26: #{simple_model_forward.1} parent=1 // pred_check
      _
    $region27: #{simple_model_forward.1} parent=1 // pred_check_branch
      %72 = sbr.rel (0) target = $region29
    $region28: #{simple_model_forward.1} parent=1 // pred_region
      _
    $region29: #{simple_model_forward.1} parent=1 // pred_fallthru
      _
    %73 = vsyncpa [#allocation3], 1
    %74 = vsyncpa [#allocation4], 1

</llo_original>
